<compile_context>
chip_gen: v7x
topology: tpu7x:2x2x1
jax: 0.10.0
libtpu: 0.0.40
codegen_flags: <defaults>
</compile_context>

<pallas_src>
import jax
import jax.numpy as jnp
from jax import lax
from jax.experimental import pallas as pl
from jax.experimental.pallas import tpu as pltpu

MiB = 1024 * 1024


def _round_up(n, m):
    return ((n + m - 1) // m) * m


def _vmem_limits():
    """Per-generation (vmem_limit_bytes, tile_budget_bytes)."""
    try:
        kind = jax.devices()[0].device_kind.lower()
    except Exception:
        kind = ""
    if "v7" in kind:
        phys = 64 * MiB          # v7x: 64 MiB VMEM per TensorCore
    elif any(t in kind for t in ("v4", "v5", "v6")):
        phys = 128 * MiB         # v4 / v5e / v5p / v6e
    else:
        phys = 64 * MiB          # conservative default
    vmem_limit = (phys * 3) // 4                 # leave compiler headroom
    tile_budget = max(vmem_limit - 12 * MiB, 8 * MiB)
    return vmem_limit, tile_budget


def _choose_tiles(M, K, H, x_isz, w_isz, o_isz, tile_budget,
                  tm_cap=1024, tk_cap=4096):
    """Pick (tm, tk, needs_k_mask).

    Priority (per perf review): (1) tm large enough that m_blocks == 1 so the
    weight is streamed once; (2) tk as large as possible (fewer grid steps,
    longer weight DMAs) within the per-generation VMEM budget.
    """
    Hl = _round_up(H, 128)                        # lane padding of H-wide tiles
    tm_full = max(8, _round_up(min(M, tm_cap), 8))

    # Candidate K tiles, descending.  Prefer exact divisors of K (no in-kernel
    # masking); fall back to masked cdiv tiling only for pathological K.
    cands = []                                    # (tk, needs_k_mask)
    if K % 128 == 0:
        q = K // 128
        for d in range(min(q, tk_cap // 128), 0, -1):
            if q % d == 0:
                cands.append((128 * d, False))
    else:
        if K <= tk_cap:
            cands.append((K, False))              # single full-width K block
        else:
            for tk in (4096, 2048, 1024, 512, 256, 128):
                cands.append((tk, True))          # overhang zero-masked in-kernel

    best = None
    for tk, mask in cands:
        tkl = _round_up(tk, 128)
        # Double-buffered weight + bias is tm-independent.
        fixed = 2 * tkl * Hl * w_isz + 2 * 8 * 128 * 4
        # Double-buffered x + f32 accumulator + output buffers scale with tm.
        per_tm = 2 * tkl * x_isz + Hl * 4 + 2 * Hl * o_isz
        if fixed >= tile_budget:
            continue
        tm_fit = ((tile_budget - fixed) // per_tm) // 8 * 8
        tm = min(tm_full, tm_fit)
        if tm < 8:
            continue
        if best is None or (tm, tk) > (best[0], best[1]):
            best = (tm, tk, mask)
        if tm == tm_full:
            break                                 # largest tk with full-height M tile
    if best is None:
        tk = 128 if K >= 128 else K
        best = (8, tk, (K % tk) != 0)
    return best


def _make_kernel(K, tk, needs_k_mask, compute_dtype):
    def kernel(x_ref, w_ref, b_ref, o_ref, acc_ref):
        # x_ref: (tm, tk)  w_ref: (tk, H)  b_ref: (1, H) f32
        # o_ref: (tm, H)   acc_ref: (tm, H) f32, resident across the K axis.
        k = pl.program_id(1)

        @pl.when(k == 0)
        def _zero():
            acc_ref[...] = jnp.zeros_like(acc_ref)

        x = x_ref[...]
        w = w_ref[...]
        if needs_k_mask:
            # Zero the K overhang of the last tile on both operands: Pallas
            # gives no guarantee about out-of-bounds input data, and NaN
            # garbage (even multiplied by zero) would poison the accumulation.
            valid = K - k * tk
            col = lax.broadcasted_iota(jnp.int32, x.shape, dimension=1)
            row = lax.broadcasted_iota(jnp.int32, w.shape, dimension=0)
            x = jnp.where(col < valid, x, 0)
            w = jnp.where(row < valid, w, 0)

        acc_ref[...] += jnp.dot(
            x.astype(compute_dtype), w.astype(compute_dtype),
            preferred_element_type=jnp.float32)

        @pl.when(k == pl.num_programs(1) - 1)
        def _store():
            o_ref[...] = (acc_ref[...] + b_ref[...]).astype(o_ref.dtype)

    return kernel


def forecasting_head_forward(x, weight, bias, *, compute_dtype=jnp.bfloat16,
                             tm_cap=1024, tk_cap=4096):
    """ForecastingHead.forward (eval mode; dropout == identity).

    x:      [B, C, P, D]   streamed in its native dtype, cast to compute_dtype
                           inside the kernel right before the MXU dot.
    weight: [P*D, H]       transposed torch layout; store it in compute_dtype
                           (bf16) so the dominant HBM stream is half-width and
                           no per-call cast is needed.
    bias:   [H]
    returns [B, C, H] in x.dtype.
    """
    B, C, P, D = x.shape
    K = P * D
    H = weight.shape[1]
    assert weight.shape == (K, H), (weight.shape, (K, H))
    out_dtype = x.dtype

    M = B * C
    x2 = x.reshape(M, K)                 # flatten(-2) + merge(B,C): metadata only
    b2 = bias.astype(jnp.float32).reshape(1, H)

    x_isz = jnp.dtype(x.dtype).itemsize
    w_isz = jnp.dtype(weight.dtype).itemsize
    o_isz = jnp.dtype(out_dtype).itemsize

    vmem_limit, tile_budget = _vmem_limits()
    tm, tk, needs_k_mask = _choose_tiles(
        M, K, H, x_isz, w_isz, o_isz, tile_budget, tm_cap=tm_cap, tk_cap=tk_cap)

    m_blocks = pl.cdiv(M, tm)
    k_blocks = pl.cdiv(K, tk)
    grid = (m_blocks, k_blocks)

    kernel = _make_kernel(K, tk, needs_k_mask, compute_dtype)

    cost = pl.CostEstimate(
        flops=2 * M * K * H,
        transcendentals=0,
        # The weight is re-streamed once per M block (m_blocks == 1 for
        # realistic MOMENT shapes after the tm raise).
        bytes_accessed=(M * K * x_isz + m_blocks * K * H * w_isz
                        + M * H * o_isz + H * 4),
    )

    out = pl.pallas_call(
        kernel,
        out_shape=jax.ShapeDtypeStruct((M, H), out_dtype),
        grid_spec=pltpu.PrefetchScalarGridSpec(
            num_scalar_prefetch=0,
            grid=grid,
            in_specs=[
                pl.BlockSpec((tm, tk), lambda i, k: (i, k)),   # x tile
                pl.BlockSpec((tk, H), lambda i, k: (k, 0)),    # weight tile
                pl.BlockSpec((1, H), lambda i, k: (0, 0)),     # bias (constant)
            ],
            out_specs=pl.BlockSpec((tm, H), lambda i, k: (i, 0)),
            scratch_shapes=[pltpu.VMEM((tm, H), jnp.float32)],
        ),
        compiler_params=pltpu.CompilerParams(
            dimension_semantics=("parallel", "arbitrary"),
            vmem_limit_bytes=vmem_limit,
        ),
        cost_estimate=cost,
    )(x2, weight, b2)

    return out.reshape(B, C, H)


def init_forecasting_head_params(key, head_nf, forecast_horizon,
                                 param_dtype=jnp.bfloat16):
    """torch nn.Linear default init: U(-1/sqrt(fan_in), 1/sqrt(fan_in)).

    Weight is returned pre-transposed, [head_nf, H], and stored once in
    param_dtype (bf16) so the kernel streams it at half width with no
    per-call cast (per perf review).
    """
    kw, kb = jax.random.split(key)
    bound = 1.0 / (head_nf ** 0.5)
    weight = jax.random.uniform(kw, (head_nf, forecast_horizon),
                                dtype=jnp.float32, minval=-bound, maxval=bound)
    bias = jax.random.uniform(kb, (forecast_horizon,), dtype=jnp.float32,
                              minval=-bound, maxval=bound)
    return weight.astype(param_dtype), bias


if __name__ == "__main__":
    # Small shapes consistent with ForecastingHead.forward.
    # (Real MOMENT shapes: D=768-1024, P=64, H=96-720.)
    B, C, P, D = 2, 4, 16, 32      # batch, n_channels, n_patches, d_model
    HORIZON = 96                   # forecast_horizon
    HEAD_NF = P * D                # 512

    key = jax.random.PRNGKey(0)
    kx, kp = jax.random.split(key)

    x = jax.random.normal(kx, (B, C, P, D), dtype=jnp.float32)
    weight, bias = init_forecasting_head_params(kp, HEAD_NF, HORIZON)

    # Reference in plain JAX: the kernel multiplies bf16 x-values by the bf16
    # weight with f32 accumulation, so compare against the bf16-quantized ref.
    xq = x.reshape(B * C, HEAD_NF).astype(jnp.bfloat16).astype(jnp.float32)
    wq = weight.astype(jnp.float32)
    ref = (xq @ wq + bias).reshape(B, C, HORIZON)

    # 1) Default tiling (single grid step for these shapes).
    out = jax.block_until_ready(forecasting_head_forward(x, weight, bias))
    assert out.shape == (B, C, HORIZON), out.shape
    assert jnp.allclose(out, ref, atol=1e-2, rtol=1e-2), float(
        jnp.max(jnp.abs(out - ref)))

    # 2) Forced multi-step K reduction (exercises accumulator init/finalize).
    out2 = jax.block_until_ready(
        forecasting_head_forward(x, weight, bias, tm_cap=8, tk_cap=128))
    assert jnp.allclose(out2, ref, atol=1e-2, rtol=1e-2), float(
        jnp.max(jnp.abs(out2 - ref)))

    # 3) M not a multiple of the row tile (exercises cdiv edge-block handling).
    xs = x[:, :3]
    refs = ref[:, :3]
    out3 = jax.block_until_ready(forecasting_head_forward(xs, weight, bias))
    assert out3.shape == (B, 3, HORIZON), out3.shape
    assert jnp.allclose(out3, refs, atol=1e-2, rtol=1e-2), float(
        jnp.max(jnp.abs(out3 - refs)))

    print("KERNEL_OK")
</pallas_src>

<mosaic_0001>
module attributes {stable_mosaic.version = 11 : i64} {
  func.func @kernel(%arg0: i32, %arg1: i32, %arg2: memref<8x512xf32, #tpu.memory_space<vmem>>, %arg3: memref<512x96xbf16, #tpu.memory_space<vmem>>, %arg4: memref<1x96xf32, #tpu.memory_space<vmem>>, %arg5: memref<8x96xf32, #tpu.memory_space<vmem>>, %arg6: memref<8x96xf32, #tpu.memory_space<vmem>>) attributes {dimension_semantics = [#tpu.dimension_semantics<parallel>, #tpu.dimension_semantics<arbitrary>], iteration_bounds = array<i64: 1, 1>, scalar_prefetch = 0 : i64, scratch_operands = 1 : i64, tpu.core_type = #tpu.core_type<tc>, window_params = [{transform_indices = @transform_0, window_bounds = array<i64: 8, 512>}, {transform_indices = @transform_1, window_bounds = array<i64: 512, 96>}, {pipeline_mode = #tpu.pipeline_mode<synchronous>, transform_indices = @transform_2, window_bounds = array<i64: 1, 96>}, {transform_indices = @transform_3, window_bounds = array<i64: 8, 96>}]} {
    %c0_i32 = arith.constant 0 : i32
    %0 = arith.cmpi eq, %arg1, %c0_i32 : i32
    %1 = arith.extui %0 : i1 to i32
    %c0_i32_0 = arith.constant 0 : i32
    %2 = arith.cmpi ne, %1, %c0_i32_0 : i32
    scf.if %2 {
      %cst_10 = arith.constant 0.000000e+00 : f32
      %13 = vector.broadcast %cst_10 : f32 to vector<8x96xf32>
      %c0_11 = arith.constant 0 : index
      %c0_12 = arith.constant 0 : index
      %14 = vector.load %arg6[%c0_11, %c0_12] : memref<8x96xf32, #tpu.memory_space<vmem>>, vector<8x96xf32>
      tpu.vector_store %arg6[%c0_11, %c0_12], %13 {strides = array<i32>} : memref<8x96xf32, #tpu.memory_space<vmem>>, vector<8x96xf32>,
    } else {
    }
    %c0 = arith.constant 0 : index
    %c0_1 = arith.constant 0 : index
    %3 = vector.load %arg2[%c0, %c0_1] : memref<8x512xf32, #tpu.memory_space<vmem>>, vector<8x512xf32>
    %c0_2 = arith.constant 0 : index
    %c0_3 = arith.constant 0 : index
    %4 = vector.load %arg3[%c0_2, %c0_3] : memref<512x96xbf16, #tpu.memory_space<vmem>>, vector<512x96xbf16>
    %c0_4 = arith.constant 0 : index
    %c0_5 = arith.constant 0 : index
    %5 = vector.load %arg6[%c0_4, %c0_5] : memref<8x96xf32, #tpu.memory_space<vmem>>, vector<8x96xf32>
    %6 = arith.truncf %3 : vector<8x512xf32> to vector<8x512xbf16>
    %cst = arith.constant dense<0.000000e+00> : vector<8x96xf32>
    %7 = tpu.matmul %6, %4, %cst {dimension_numbers = #tpu.dot_dimension_numbers<[1], [0], [0], [1], [0, 0, 1, 1], [], []>} : vector<8x512xbf16>, vector<512x96xbf16>, vector<8x96xf32> -> vector<8x96xf32>
    %8 = arith.addf %5, %7 : vector<8x96xf32>
    %c0_6 = arith.constant 0 : index
    %c0_7 = arith.constant 0 : index
    %9 = vector.load %arg6[%c0_6, %c0_7] : memref<8x96xf32, #tpu.memory_space<vmem>>, vector<8x96xf32>
    tpu.vector_store %arg6[%c0_6, %c0_7], %8 {strides = array<i32>} : memref<8x96xf32, #tpu.memory_space<vmem>>, vector<8x96xf32>,
    %c0_i32_8 = arith.constant 0 : i32
    %10 = arith.cmpi eq, %arg1, %c0_i32_8 : i32
    %11 = arith.extui %10 : i1 to i32
    %c0_i32_9 = arith.constant 0 : i32
    %12 = arith.cmpi ne, %11, %c0_i32_9 : i32
    scf.if %12 {
      %c0_10 = arith.constant 0 : index
      %c0_11 = arith.constant 0 : index
      %13 = vector.load %arg6[%c0_10, %c0_11] : memref<8x96xf32, #tpu.memory_space<vmem>>, vector<8x96xf32>
      %c0_12 = arith.constant 0 : index
      %c0_13 = arith.constant 0 : index
      %14 = vector.load %arg4[%c0_12, %c0_13] : memref<1x96xf32, #tpu.memory_space<vmem>>, vector<1x96xf32>
      %15 = vector.broadcast %14 : vector<1x96xf32> to vector<8x96xf32>
      %16 = arith.addf %13, %15 : vector<8x96xf32>
      %c0_14 = arith.constant 0 : index
      %c0_15 = arith.constant 0 : index
      %17 = vector.load %arg5[%c0_14, %c0_15] : memref<8x96xf32, #tpu.memory_space<vmem>>, vector<8x96xf32>
      tpu.vector_store %arg5[%c0_14, %c0_15], %16 {strides = array<i32>} : memref<8x96xf32, #tpu.memory_space<vmem>>, vector<8x96xf32>,
    } else {
    }
    return
  }
  func.func @transform_0(%arg0: i32, %arg1: i32) -> (i32, i32) {
    %c0_i32 = arith.constant 0 : i32
    return %arg0, %arg1 : i32, i32
  }
  func.func @transform_1(%arg0: i32, %arg1: i32) -> (i32, i32) {
    %c0_i32 = arith.constant 0 : i32
    %c0_i32_0 = arith.constant 0 : i32
    return %arg1, %c0_i32 : i32, i32
  }
  func.func @transform_2(%arg0: i32, %arg1: i32) -> (i32, i32) {
    %c0_i32 = arith.constant 0 : i32
    %c0_i32_0 = arith.constant 0 : i32
    %c0_i32_1 = arith.constant 0 : i32
    return %c0_i32, %c0_i32_0 : i32, i32
  }
  func.func @transform_3(%arg0: i32, %arg1: i32) -> (i32, i32) {
    %c0_i32 = arith.constant 0 : i32
    %c0_i32_0 = arith.constant 0 : i32
    return %arg0, %c0_i32 : i32, i32
  }
}

</mosaic_0001>

<llo_original>
// kernel: tpu_custom_call.1
$region0: #{tpu_custom_call.1}
  #allocation0 [shape = 'u32[]', space=smem, size = 0x4, offset = 0x4, fixed_abs, tag = 'smem constant byte address 0x4 - core index']
  #allocation1 [shape = 'u32[144,128]{1,0:T(1,128)}', space=vmem, size = 0x12000, scoped, tag = 'internal scratch']
  #allocation2 [shape = 'f32[8,96]{1,0:T(8,128)}', space=vmem, size = 0x1000, scoped, tag = 'scratch operand']
  %s0 = inlined_call_operand.vmem [shape: f32[8,512], index: 0, kind: input, shape index: {}]
  %s1 = inlined_call_operand.vmem [shape: bf16[512,96], index: 1, kind: input, shape index: {}]
  %s2 = inlined_call_operand.vmem [shape: f32[1,96], index: 2, kind: input, shape index: {}]
  %s3 = inlined_call_operand.hbm [shape: f32[8,96], index: 3, kind: output, shape index: {}]
  %s4 = sld [smem:[#allocation0]]
  $region30: #{tpu_custom_call.1} parent=0
    _
  %s6 = ssub.s32 1, %s4
  %s7 = scalar_select 0, %s6, %s4
  $region1: #{tpu_custom_call.1} parent=0
    #allocation3 [shape = 'u8[4096]{0}', space=vmem, size = 0x1000, scoped, tag = 'output window, operand 0, single buffered']
    #allocation4 [shape = 's32[1]{0}', space=sflag, size = 0x4, scoped, tag = 'scoped memory for tpu_custom_call.1']
    %8 = vsyncpa [#allocation4], 0
    // Predicated region
    $region2: #{tpu_custom_call.1} parent=1 // pred_check
      _
    $region3: #{tpu_custom_call.1} parent=1 // pred_check_branch
      %10 = sbr.rel (0) target = $region5
    $region4: #{tpu_custom_call.1} parent=1 // pred_region
      _
    $region5: #{tpu_custom_call.1} parent=1 // pred_fallthru
      _
    // Predicated region
    $region6: #{tpu_custom_call.1} parent=1 // pred_check
      _
    $region7: #{tpu_custom_call.1} parent=1 // pred_check_branch
      %12 = sbr.rel (0) target = $region9
    $region8: #{tpu_custom_call.1} parent=1 // pred_region
      _
    $region9: #{tpu_custom_call.1} parent=1 // pred_fallthru
      _
    // Predicated region
    $region10: #{tpu_custom_call.1} parent=1 // pred_check
      _
    $region11: #{tpu_custom_call.1} parent=1 // pred_check_branch
      %14 = sbr.rel (0) target = $region13
    $region12: #{tpu_custom_call.1} parent=1 // pred_region
      _
    $region13: #{tpu_custom_call.1} parent=1 // pred_fallthru
      _
    %p16 = scmp.eq.s32.totalorder 0, 0
    // Predicated region
    $region14: #{tpu_custom_call.1} parent=1 // pred_check
      %p17 = pneg %p16
    $region15: #{tpu_custom_call.1} parent=1 // pred_check_branch
      %19 = sbr.rel (%p17) target = $region17
    $region16: #{tpu_custom_call.1} parent=1 // pred_region
      %vm20 = vcmask 785408
      %21 = vst.msk [vmem:[#allocation2] sm:$0xff] %vm20, 0.0
    $region17: #{tpu_custom_call.1} parent=1 // pred_fallthru
      _
    %v22 = vld [vmem:[%s0] sm:$0xff]
    %v23 = vld [vmem:[%s0 + $0x8] sm:$0xff]
    %v24 = vld [vmem:[%s0 + $0x10] sm:$0xff]
    %v25 = vld [vmem:[%s0 + $0x18] sm:$0xff]
    %v26 = vld [vmem:[%s1] sm:$0xf]
    %v27 = vld [vmem:[%s1 + $0x4] sm:$0xf]
    %v28 = vld [vmem:[%s1 + $0x8] sm:$0xf]
    %v29 = vld [vmem:[%s1 + $0xc] sm:$0xf]
    %v30 = vld [vmem:[%s1 + $0x10] sm:$0xf]
    %v31 = vld [vmem:[%s1 + $0x14] sm:$0xf]
    %v32 = vld [vmem:[%s1 + $0x18] sm:$0xf]
    %v33 = vld [vmem:[%s1 + $0x1c] sm:$0xf]
    %v34 = vld [vmem:[%s1 + $0x20] sm:$0xf]
    %v35 = vld [vmem:[%s1 + $0x24] sm:$0xf]
    %v36 = vld [vmem:[%s1 + $0x28] sm:$0xf]
    %v37 = vld [vmem:[%s1 + $0x2c] sm:$0xf]
    %v38 = vld [vmem:[%s1 + $0x30] sm:$0xf]
    %v39 = vld [vmem:[%s1 + $0x34] sm:$0xf]
    %v40 = vld [vmem:[%s1 + $0x38] sm:$0xf]
    %v41 = vld [vmem:[%s1 + $0x3c] sm:$0xf]
    %v42 = vld [vmem:[%s1 + $0x40] sm:$0xf]
    %v43 = vld [vmem:[%s1 + $0x44] sm:$0xf]
    %v44 = vld [vmem:[%s1 + $0x48] sm:$0xf]
    %v45 = vld [vmem:[%s1 + $0x4c] sm:$0xf]
    %v46 = vld [vmem:[%s1 + $0x50] sm:$0xf]
    %v47 = vld [vmem:[%s1 + $0x54] sm:$0xf]
    %v48 = vld [vmem:[%s1 + $0x58] sm:$0xf]
    %v49 = vld [vmem:[%s1 + $0x5c] sm:$0xf]
    %v50 = vld [vmem:[%s1 + $0x60] sm:$0xf]
    %v51 = vld [vmem:[%s1 + $0x64] sm:$0xf]
    %v52 = vld [vmem:[%s1 + $0x68] sm:$0xf]
    %v53 = vld [vmem:[%s1 + $0x6c] sm:$0xf]
    %v54 = vld [vmem:[%s1 + $0x70] sm:$0xf]
    %v55 = vld [vmem:[%s1 + $0x74] sm:$0xf]
    %v56 = vld [vmem:[%s1 + $0x78] sm:$0xf]
    %v57 = vld [vmem:[%s1 + $0x7c] sm:$0xf]
    %v58 = vld [vmem:[%s1 + $0x80] sm:$0xf]
    %v59 = vld [vmem:[%s1 + $0x84] sm:$0xf]
    %v60 = vld [vmem:[%s1 + $0x88] sm:$0xf]
    %v61 = vld [vmem:[%s1 + $0x8c] sm:$0xf]
    %v62 = vld [vmem:[%s1 + $0x90] sm:$0xf]
    %v63 = vld [vmem:[%s1 + $0x94] sm:$0xf]
    %v64 = vld [vmem:[%s1 + $0x98] sm:$0xf]
    %v65 = vld [vmem:[%s1 + $0x9c] sm:$0xf]
    %v66 = vld [vmem:[%s1 + $0xa0] sm:$0xf]
    %v67 = vld [vmem:[%s1 + $0xa4] sm:$0xf]
    %v68 = vld [vmem:[%s1 + $0xa8] sm:$0xf]
    %v69 = vld [vmem:[%s1 + $0xac] sm:$0xf]
    %v70 = vld [vmem:[%s1 + $0xb0] sm:$0xf]
    %v71 = vld [vmem:[%s1 + $0xb4] sm:$0xf]
    %v72 = vld [vmem:[%s1 + $0xb8] sm:$0xf]
    %v73 = vld [vmem:[%s1 + $0xbc] sm:$0xf]
    %v74 = vld [vmem:[%s1 + $0xc0] sm:$0xf]
    %v75 = vld [vmem:[%s1 + $0xc4] sm:$0xf]
    %v76 = vld [vmem:[%s1 + $0xc8] sm:$0xf]
    %v77 = vld [vmem:[%s1 + $0xcc] sm:$0xf]
    %v78 = vld [vmem:[%s1 + $0xd0] sm:$0xf]
    %v79 = vld [vmem:[%s1 + $0xd4] sm:$0xf]
    %v80 = vld [vmem:[%s1 + $0xd8] sm:$0xf]
    %v81 = vld [vmem:[%s1 + $0xdc] sm:$0xf]
    %v82 = vld [vmem:[%s1 + $0xe0] sm:$0xf]
    %v83 = vld [vmem:[%s1 + $0xe4] sm:$0xf]
    %v84 = vld [vmem:[%s1 + $0xe8] sm:$0xf]
    %v85 = vld [vmem:[%s1 + $0xec] sm:$0xf]
    %v86 = vld [vmem:[%s1 + $0xf0] sm:$0xf]
    %v87 = vld [vmem:[%s1 + $0xf4] sm:$0xf]
    %v88 = vld [vmem:[%s1 + $0xf8] sm:$0xf]
    %v89 = vld [vmem:[%s1 + $0xfc] sm:$0xf]
    %v90 = vld [vmem:[#allocation2] sm:$0xff]
    %v91 = vpack.c.bf16 %v22, %v22
    %v92 = vpack.c.bf16 %v23, %v23
    %v93 = vpack.c.bf16 %v24, %v24
    %v94 = vpack.c.bf16 %v25, %v25
    %v159 = vunpack.c.l.b16 %v26
    %v160 = vunpack.c.l.b16 %v27
    %v161 = vunpack.c.l.b16 %v28
    %v162 = vunpack.c.l.b16 %v29
    %v163 = vunpack.c.l.b16 %v30
    %v164 = vunpack.c.l.b16 %v31
    %v165 = vunpack.c.l.b16 %v32
    %v166 = vunpack.c.l.b16 %v33
    %v167 = vunpack.c.l.b16 %v34
    %v168 = vunpack.c.l.b16 %v35
    %v169 = vunpack.c.l.b16 %v36
    %v170 = vunpack.c.l.b16 %v37
    %v171 = vunpack.c.l.b16 %v38
    %v172 = vunpack.c.l.b16 %v39
    %v173 = vunpack.c.l.b16 %v40
    %v174 = vunpack.c.l.b16 %v41
    %v175 = vunpack.c.l.b16 %v42
    %v176 = vunpack.c.l.b16 %v43
    %v177 = vunpack.c.l.b16 %v44
    %v178 = vunpack.c.l.b16 %v45
    %v179 = vunpack.c.l.b16 %v46
    %v180 = vunpack.c.l.b16 %v47
    %v181 = vunpack.c.l.b16 %v48
    %v182 = vunpack.c.l.b16 %v49
    %v183 = vunpack.c.l.b16 %v50
    %v184 = vunpack.c.l.b16 %v51
    %v185 = vunpack.c.l.b16 %v52
    %v186 = vunpack.c.l.b16 %v53
    %v187 = vunpack.c.l.b16 %v54
    %v188 = vunpack.c.l.b16 %v55
    %v189 = vunpack.c.l.b16 %v56
    %v190 = vunpack.c.l.b16 %v57
    %v191 = vunpack.c.l.b16 %v58
    %v192 = vunpack.c.l.b16 %v59
    %v193 = vunpack.c.l.b16 %v60
    %v194 = vunpack.c.l.b16 %v61
    %v195 = vunpack.c.l.b16 %v62
    %v196 = vunpack.c.l.b16 %v63
    %v197 = vunpack.c.l.b16 %v64
    %v198 = vunpack.c.l.b16 %v65
    %v199 = vunpack.c.l.b16 %v66
    %v200 = vunpack.c.l.b16 %v67
    %v201 = vunpack.c.l.b16 %v68
    %v202 = vunpack.c.l.b16 %v69
    %v203 = vunpack.c.l.b16 %v70
    %v204 = vunpack.c.l.b16 %v71
    %v205 = vunpack.c.l.b16 %v72
    %v206 = vunpack.c.l.b16 %v73
    %v207 = vunpack.c.l.b16 %v74
    %v208 = vunpack.c.l.b16 %v75
    %v209 = vunpack.c.l.b16 %v76
    %v210 = vunpack.c.l.b16 %v77
    %v211 = vunpack.c.l.b16 %v78
    %v212 = vunpack.c.l.b16 %v79
    %v213 = vunpack.c.l.b16 %v80
    %v214 = vunpack.c.l.b16 %v81
    %v215 = vunpack.c.l.b16 %v82
    %v216 = vunpack.c.l.b16 %v83
    %v217 = vunpack.c.l.b16 %v84
    %v218 = vunpack.c.l.b16 %v85
    %v219 = vunpack.c.l.b16 %v86
    %v220 = vunpack.c.l.b16 %v87
    %v221 = vunpack.c.l.b16 %v88
    %v222 = vunpack.c.l.b16 %v89
    %v223 = vpack.c.b16 %v160, %v159
    %v224 = vpack.c.b16 %v162, %v161
    %v225 = vpack.c.b16 %v164, %v163
    %v226 = vpack.c.b16 %v166, %v165
    %v227 = vpack.c.b16 %v168, %v167
    %v228 = vpack.c.b16 %v170, %v169
    %v229 = vpack.c.b16 %v172, %v171
    %v230 = vpack.c.b16 %v174, %v173
    %v231 = vpack.c.b16 %v176, %v175
    %v232 = vpack.c.b16 %v178, %v177
    %v233 = vpack.c.b16 %v180, %v179
    %v234 = vpack.c.b16 %v182, %v181
    %v235 = vpack.c.b16 %v184, %v183
    %v236 = vpack.c.b16 %v186, %v185
    %v237 = vpack.c.b16 %v188, %v187
    %v238 = vpack.c.b16 %v190, %v189
    %v239 = vpack.c.b16 %v192, %v191
    %v240 = vpack.c.b16 %v194, %v193
    %v241 = vpack.c.b16 %v196, %v195
    %v242 = vpack.c.b16 %v198, %v197
    %v243 = vpack.c.b16 %v200, %v199
    %v244 = vpack.c.b16 %v202, %v201
    %v245 = vpack.c.b16 %v204, %v203
    %v246 = vpack.c.b16 %v206, %v205
    %v247 = vpack.c.b16 %v208, %v207
    %v248 = vpack.c.b16 %v210, %v209
    %v249 = vpack.c.b16 %v212, %v211
    %v250 = vpack.c.b16 %v214, %v213
    %v251 = vpack.c.b16 %v216, %v215
    %v252 = vpack.c.b16 %v218, %v217
    %v253 = vpack.c.b16 %v220, %v219
    %v254 = vpack.c.b16 %v222, %v221
    %287 = vmatprep.subr.bf16.mxu0 0
    %288 = vmatpush1.bf16.msra.mxu0 %v223
    %289 = vmatprep.subr.bf16.mxu0 0
    %290 = vmatpush1.bf16.msra.mxu0 %v224
    %291 = vmatprep.subr.bf16.mxu0 0
    %292 = vmatpush1.bf16.msra.mxu0 %v225
    %293 = vmatprep.subr.bf16.mxu0 0
    %294 = vmatpush1.bf16.msra.mxu0 %v226
    %295 = vmatprep.subr.bf16.mxu0 0
    %296 = vmatpush1.bf16.msra.mxu0 %v227
    %297 = vmatprep.subr.bf16.mxu0 0
    %298 = vmatpush1.bf16.msra.mxu0 %v228
    %299 = vmatprep.subr.bf16.mxu0 0
    %300 = vmatpush1.bf16.msra.mxu0 %v229
    %301 = vmatprep.subr.bf16.mxu0 0
    %302 = vmatpush1.bf16.msra.mxu0 %v230
    %303 = vmatprep.subr.bf16.mxu0 0
    %304 = vmatpush1.bf16.msra.mxu0 %v231
    %305 = vmatprep.subr.bf16.mxu0 0
    %306 = vmatpush1.bf16.msra.mxu0 %v232
    %307 = vmatprep.subr.bf16.mxu0 0
    %308 = vmatpush1.bf16.msra.mxu0 %v233
    %309 = vmatprep.subr.bf16.mxu0 0
    %310 = vmatpush1.bf16.msra.mxu0 %v234
    %311 = vmatprep.subr.bf16.mxu0 0
    %312 = vmatpush1.bf16.msra.mxu0 %v235
    %313 = vmatprep.subr.bf16.mxu0 0
    %314 = vmatpush1.bf16.msra.mxu0 %v236
    %315 = vmatprep.subr.bf16.mxu0 0
    %316 = vmatpush1.bf16.msra.mxu0 %v237
    %317 = vmatprep.subr.bf16.mxu0 0
    %318 = vmatpush1.bf16.msra.mxu0 %v238
    %319 = vmatprep.mubr.bf16.mxu0 %v92
    %320 = vmatmul.mubr.bf16.gmra.mrb[0].mxu0 %v91
    %v321 = vpop.f32.mrb[0].mxu0
    %v322 = vadd.f32 0.0, %v321
    %v323 = vpop.f32.mrb[0].mxu0
    %v324 = vpop.f32.mrb[0].mxu0
    %v325 = vpop.f32.mrb[0].mxu0
    %326 = vdwg.mxu0
    %327 = vmatprep.subr.bf16.mxu0 0
    %328 = vmatpush1.bf16.msra.mxu0 %v239
    %329 = vmatprep.subr.bf16.mxu0 0
    %330 = vmatpush1.bf16.msra.mxu0 %v240
    %331 = vmatprep.subr.bf16.mxu0 0
    %332 = vmatpush1.bf16.msra.mxu0 %v241
    %333 = vmatprep.subr.bf16.mxu0 0
    %334 = vmatpush1.bf16.msra.mxu0 %v242
    %335 = vmatprep.subr.bf16.mxu0 0
    %336 = vmatpush1.bf16.msra.mxu0 %v243
    %337 = vmatprep.subr.bf16.mxu0 0
    %338 = vmatpush1.bf16.msra.mxu0 %v244
    %339 = vmatprep.subr.bf16.mxu0 0
    %340 = vmatpush1.bf16.msra.mxu0 %v245
    %341 = vmatprep.subr.bf16.mxu0 0
    %342 = vmatpush1.bf16.msra.mxu0 %v246
    %343 = vmatprep.subr.bf16.mxu0 0
    %344 = vmatpush1.bf16.msra.mxu0 %v247
    %345 = vmatprep.subr.bf16.mxu0 0
    %346 = vmatpush1.bf16.msra.mxu0 %v248
    %347 = vmatprep.subr.bf16.mxu0 0
    %348 = vmatpush1.bf16.msra.mxu0 %v249
    %349 = vmatprep.subr.bf16.mxu0 0
    %350 = vmatpush1.bf16.msra.mxu0 %v250
    %351 = vmatprep.subr.bf16.mxu0 0
    %352 = vmatpush1.bf16.msra.mxu0 %v251
    %353 = vmatprep.subr.bf16.mxu0 0
    %354 = vmatpush1.bf16.msra.mxu0 %v252
    %355 = vmatprep.subr.bf16.mxu0 0
    %356 = vmatpush1.bf16.msra.mxu0 %v253
    %357 = vmatprep.subr.bf16.mxu0 0
    %358 = vmatpush1.bf16.msra.mxu0 %v254
    %359 = vmatprep.mubr.bf16.mxu0 %v94
    %360 = vmatmul.mubr.bf16.gmra.mrb[0].mxu0 %v93
    %v361 = vpop.f32.mrb[0].mxu0
    %v362 = vadd.f32 %v322, %v361
    %v363 = vpop.f32.mrb[0].mxu0
    %v364 = vpop.f32.mrb[0].mxu0
    %v365 = vpop.f32.mrb[0].mxu0
    %366 = vdwg.mxu0
    %v367 = vadd.f32 %v90, %v362
    %vm368 = vcmask 785408
    %369 = vst.msk [vmem:[#allocation2] sm:$0xff] %vm368, %v367
    // Predicated region
    $region18: #{tpu_custom_call.1} parent=1 // pred_check
      %p370 = pneg %p16
    $region19: #{tpu_custom_call.1} parent=1 // pred_check_branch
      %372 = sbr.rel (%p370) target = $region21
    $region20: #{tpu_custom_call.1} parent=1 // pred_region
      %v373 = vld [vmem:[#allocation2] sm:$0xff]
      %v374 = vld [vmem:[%s2] sm:$0x1]
      %v376 = vlaneseq
      %v377 = vshrl.u32 %v376, 7
      %v378 = vsub.s32 0, %v377
      %v379 = vrot.slane %v374, %v378
      %v381 = vadd.f32 %v373, %v379
      %382 = vst.msk [vmem:[#allocation3] sm:$0xff] %vm368, %v381
    $region21: #{tpu_custom_call.1} parent=1 // pred_fallthru
      _
    // Predicated region
    $region22: #{tpu_custom_call.1} parent=1 // pred_check
      _
    $region23: #{tpu_custom_call.1} parent=1 // pred_check_branch
      %384 = sbr.rel (0) target = $region25
    $region24: #{tpu_custom_call.1} parent=1 // pred_region
      %s386 = ssub.s32 128, 128
      %387 = vsyncadd [#allocation4], %s386
      %s389 = sshll.u32 [#allocation3], 4
      %s390 = int_to_ptr.vmem [resolvable:$true] %s389
      %392 = dma.vmem_to_hbm [thread:$0]  %s390, 128, %s3, [#allocation4]
    $region25: #{tpu_custom_call.1} parent=1 // pred_fallthru
      _
    // Predicated region
    $region26: #{tpu_custom_call.1} parent=1 // pred_check
      _
    $region27: #{tpu_custom_call.1} parent=1 // pred_check_branch
      %394 = sbr.rel (0) target = $region29
    $region28: #{tpu_custom_call.1} parent=1 // pred_region
      %395 = dma.done [#allocation4], 128
    $region29: #{tpu_custom_call.1} parent=1 // pred_fallthru
      _
    %396 = vsyncpa [#allocation4], 1

</llo_original>
